<compile_context>
chip_gen: v6e
topology: v6e:2x2x1
jax: 0.10.0
libtpu: 0.0.40
codegen_flags: <defaults>
</compile_context>

<pallas_src>
import jax
import jax.numpy as jnp
from jax.experimental import pallas as pl
from jax.experimental.pallas import tpu as pltpu

_MAX_WIDTH = 8192              # cap on the flattened last (lane) dimension
_TARGET_CHUNK_BYTES = 8 << 20  # ~8 MiB per DMA chunk (DMA never touches VMEM)
_MAX_OUTSTANDING = 8           # cap on simultaneously outstanding DMAs


def _make_dma_copy_kernel(chunks):
    """Build a kernel that issues one HBM->HBM DMA per static row-chunk, then waits."""

    def kernel(x_hbm, o_hbm, sems):
        copies = []
        for i, (start, size) in enumerate(chunks):
            cp = pltpu.make_async_copy(
                x_hbm.at[pl.ds(start, size), :],
                o_hbm.at[pl.ds(start, size), :],
                sems.at[i],
            )
            cp.start()
            copies.append(cp)
        for cp in copies:
            cp.wait()

    return kernel


def _pallas_identity_copy(x):
    """Materialize a fresh buffer equal to `x` via chunked HBM->HBM async DMA."""
    orig_shape = x.shape
    total = x.size
    if total == 0:
        return x
    itemsize = jnp.dtype(x.dtype).itemsize

    # Flatten to a 2D (rows, width) slab. width = largest power-of-two divisor of
    # `total`, capped at _MAX_WIDTH (lane-dense for 128-divisible sizes; for odd
    # sizes the DMA engine does not care — nothing is staged in VMEM).
    width = 1
    while width * 2 <= _MAX_WIDTH and total % (width * 2) == 0:
        width *= 2
    rows = total // width
    flat = x.reshape(rows, width)

    # Static row chunks: each ~_TARGET_CHUNK_BYTES, at most _MAX_OUTSTANDING DMAs.
    bytes_per_row = width * itemsize
    chunk_rows = max(1, _TARGET_CHUNK_BYTES // bytes_per_row)
    n_chunks = (rows + chunk_rows - 1) // chunk_rows
    if n_chunks > _MAX_OUTSTANDING:
        chunk_rows = (rows + _MAX_OUTSTANDING - 1) // _MAX_OUTSTANDING
    chunks = []
    start = 0
    while start < rows:
        size = min(chunk_rows, rows - start)
        chunks.append((start, size))
        start += size

    out = pl.pallas_call(
        _make_dma_copy_kernel(tuple(chunks)),
        out_shape=jax.ShapeDtypeStruct((rows, width), x.dtype),
        in_specs=[pl.BlockSpec(memory_space=pl.ANY)],
        out_specs=pl.BlockSpec(memory_space=pl.ANY),
        scratch_shapes=[pltpu.SemaphoreType.DMA((len(chunks),))],
        cost_estimate=pl.CostEstimate(
            flops=0,
            transcendentals=0,
            bytes_accessed=2 * total * itemsize,
        ),
    )(flat)
    return out.reshape(orig_shape)


def custom_layer_forward(x, some_param=None, materialize=False):
    """Pallas equivalent of CustomLayer(some_param).forward(x).

    TODO(synk): CustomLayer.forward is empty (`pass`, returns None); implemented as an
    identity pass-through since returning None has no Pallas equivalent. `some_param`
    is stored but never used by the original module, so it is ignored.

    Default (materialize=False): zero-cost — returns `x` directly, no kernel launch.
    materialize=True: forces a distinct output buffer via chunked HBM->HBM DMA.
    """
    del some_param  # unused by the original module's forward
    x = jnp.asarray(x)
    if not materialize:
        return x
    return _pallas_identity_copy(x)


if __name__ == "__main__":
    key = jax.random.PRNGKey(0)
    # Small NCHW input: batch=2, channels=4, 16x16 spatial.
    x = jax.random.normal(key, (2, 4, 16, 16), dtype=jnp.float32)

    # Fast path (no kernel launch): the recommended implementation of an identity op.
    y_fast = jax.block_until_ready(custom_layer_forward(x, some_param=42))

    # Materializing path: exercises the HBM->HBM DMA copy kernel.
    y_copy = jax.block_until_ready(
        custom_layer_forward(x, some_param=42, materialize=True)
    )

    # Also exercise a sub-32-bit dtype (no special-casing needed on the DMA path).
    x_bf16 = x.astype(jnp.bfloat16)
    y_bf16 = jax.block_until_ready(
        custom_layer_forward(x_bf16, some_param=42, materialize=True)
    )

    assert y_fast.shape == x.shape and y_fast.dtype == x.dtype
    assert y_copy.shape == x.shape and y_copy.dtype == x.dtype
    assert y_bf16.shape == x_bf16.shape and y_bf16.dtype == x_bf16.dtype
    assert bool(jnp.array_equal(y_fast, x))
    assert bool(jnp.array_equal(y_copy, x))
    assert bool(jnp.array_equal(y_bf16, x_bf16))
    print("KERNEL_OK")
</pallas_src>

<mosaic_0001>
module attributes {stable_mosaic.version = 11 : i64} {
  func.func @kernel(%arg0: memref<1x2048xf32, #tpu.memory_space<any>>, %arg1: memref<1x2048xf32, #tpu.memory_space<any>>, %arg2: memref<1x!tpu.dma_semaphore, #tpu.memory_space<semaphore_mem>>) attributes {dimension_semantics = [], scalar_prefetch = 0 : i64, scratch_operands = 1 : i64, tpu.core_type = #tpu.core_type<tc>} {
    %c0_i32 = arith.constant 0 : i32
    %c0_i32_0 = arith.constant 0 : i32
    %c0_i32_1 = arith.constant 0 : i32
    %0 = tpu.memref_slice %arg0[%c0_i32_0, %c0_i32_1] : memref<1x2048xf32, #tpu.memory_space<any>> -> memref<1x2048xf32, #tpu.memory_space<any>>
    %c0_i32_2 = arith.constant 0 : i32
    %c0_i32_3 = arith.constant 0 : i32
    %1 = tpu.memref_slice %arg1[%c0_i32_2, %c0_i32_3] : memref<1x2048xf32, #tpu.memory_space<any>> -> memref<1x2048xf32, #tpu.memory_space<any>>
    %2 = tpu.memref_slice %arg2[%c0_i32] : memref<1x!tpu.dma_semaphore, #tpu.memory_space<semaphore_mem>> -> memref<1x!tpu.dma_semaphore, #tpu.memory_space<semaphore_mem>>
    %3 = tpu.memref_squeeze %2 : memref<1x!tpu.dma_semaphore, #tpu.memory_space<semaphore_mem>> -> memref<!tpu.dma_semaphore, #tpu.memory_space<semaphore_mem>>
    tpu.enqueue_dma source(%0 : memref<1x2048xf32, #tpu.memory_space<any>>) target(%1 : memref<1x2048xf32, #tpu.memory_space<any>>) target_semaphore(%3 : memref<!tpu.dma_semaphore, #tpu.memory_space<semaphore_mem>>)
    %c0_i32_4 = arith.constant 0 : i32
    %c0_i32_5 = arith.constant 0 : i32
    %c0_i32_6 = arith.constant 0 : i32
    %4 = tpu.memref_slice %arg0[%c0_i32_5, %c0_i32_6] : memref<1x2048xf32, #tpu.memory_space<any>> -> memref<1x2048xf32, #tpu.memory_space<any>>
    %c0_i32_7 = arith.constant 0 : i32
    %c0_i32_8 = arith.constant 0 : i32
    %5 = tpu.memref_slice %arg1[%c0_i32_7, %c0_i32_8] : memref<1x2048xf32, #tpu.memory_space<any>> -> memref<1x2048xf32, #tpu.memory_space<any>>
    %6 = tpu.memref_slice %arg2[%c0_i32_4] : memref<1x!tpu.dma_semaphore, #tpu.memory_space<semaphore_mem>> -> memref<1x!tpu.dma_semaphore, #tpu.memory_space<semaphore_mem>>
    %7 = tpu.memref_squeeze %6 : memref<1x!tpu.dma_semaphore, #tpu.memory_space<semaphore_mem>> -> memref<!tpu.dma_semaphore, #tpu.memory_space<semaphore_mem>>
    tpu.wait_dma2 semaphore(%7 : memref<!tpu.dma_semaphore, #tpu.memory_space<semaphore_mem>>) src(%4 : memref<1x2048xf32, #tpu.memory_space<any>>) dst(%5 : memref<1x2048xf32, #tpu.memory_space<any>>)
    return
  }
}

</mosaic_0001>

<llo_original>
// kernel: tpu_custom_call.1
$region0: #{tpu_custom_call.1}
  #allocation0 [shape = 'u32[]', space=smem, size = 0x4, offset = 0x4, fixed_abs, tag = 'smem constant byte address 0x4 - core index']
  #allocation1 [shape = 'u32[144,128]{1,0:T(1,128)}', space=vmem, size = 0x12000, scoped, tag = 'internal scratch']
  #allocation2 [shape = 's32[1]{0}', space=sflag, size = 0x4, scoped, tag = 'scratch operand']
  #allocation3 [shape = 's32[]', space=sflag, size = 0x4, offset = 0, fixed_abs, tag = 'sflag constant byte address 0x0 - dummy sync flag']
  #allocation4 [shape = 'u32[0]{0}', space=smem, size = 0, offset = 0, fixed_abs, tag = 'smem constant byte address 0x0 - null']
  %s0 = inlined_call_operand.hbm [shape: f32[1,2048], index: 0, kind: input, shape index: {}]
  %s1 = inlined_call_operand.hbm [shape: f32[1,2048], index: 1, kind: output, shape index: {}]
  %s2 = sld [smem:[#allocation0]]
  $region2: #{tpu_custom_call.1} parent=0
    _
  %s4 = ssub.s32 1, %s2
  %s5 = scalar_select 0, %s4, %s2
  %s7 = sshll.u32 1, 14
  %s8 = sxor.u32 4294967295, %s7
  %12 = dma.general %s0, 256, %s1, [#allocation2], 131072, [#allocation4], 0, 0
  %s13 = smul.u32 1, 16
  %s14 = sshll.u32 %s13, 4
  %15 = dma.done [#allocation2], %s14
  %16 = vsyncmov [#allocation2]
  %s17 = vpop.sfrf %16
  %p18 = scmp.eq.s32.totalorder %s17, 0
  %p19 = pneg %p18
  %21 = shalt.err (%p19)

</llo_original>
